<compile_context>
chip_gen: v5e
topology: v5e:2x2
jax: 0.10.0
libtpu: 0.0.40
codegen_flags: <defaults>
</compile_context>

<pallas_src>
import numpy as np
import jax
import jax.numpy as jnp
from jax.experimental import pallas as pl
from jax.experimental.pallas import tpu as pltpu


def msa_embedding_kernel(idx_ref, pe_ref, tab_ref, o_ref):
    # idx_ref: (1, NT, L, 1) int32   folded token index: tok + V * (seq != 0)
    # pe_ref : (1, L, D)     f32     positional-encoding rows for this batch
    # tab_ref: (2V, D)       bf16/f32  folded table: rows [0,V)=emb+q[0], [V,2V)=emb+q[1]
    # o_ref  : (1, NT, L, D) out dtype
    nt, L, D = o_ref.shape[1], o_ref.shape[2], o_ref.shape[3]
    V2 = tab_ref.shape[0]

    pe = pe_ref[0]                                                  # (L, D) f32
    tab = tab_ref[...]                                              # (2V, D)
    lane_iota = jax.lax.broadcasted_iota(jnp.int32, (L, V2), 1)     # hoisted out of the loop

    # One lane-dense (L, D) slab per sequence: a 2-D one-hot MXU gather + f32 add.
    # No reshape of the tile, so no relayout when L is not a multiple of 8; stores are
    # unmasked full-slab vst when D is a multiple of 128.
    for i in range(nt):
        oh = (idx_ref[0, i] == lane_iota).astype(tab.dtype)         # (L, 2V) exact 0/1
        emb = jnp.dot(oh, tab, preferred_element_type=jnp.float32)  # (L, D) f32 accumulate
        o_ref[0, i] = (emb + pe).astype(o_ref.dtype)
    # TODO(synk): nn.Dropout(p_pe_drop) is stochastic; applied as identity (eval mode).


def _vmem_limit_bytes():
    """Generation-aware scoped-VMEM limit: ~2/3 of physical VMEM (v7x=64MiB -> ~42MiB)."""
    try:
        cap = int(pltpu.get_tpu_info().vmem_capacity_bytes)
    except Exception:
        cap = 64 * 1024 * 1024  # conservative: assume v7x physical VMEM
    return max(32 * 1024 * 1024, min(int(cap * 2 // 3), 96 * 1024 * 1024))


def _choose_n_tile(N, L, D, V2, out_itemsize, tab_itemsize, vmem_limit):
    """Pick the sequences-per-step tile from an explicit VMEM footprint budget.

    Accounts for: double-buffered output tile, double-buffered lane-padded (L, 1) int32
    token block (padded to 128 lanes -> 512 B per token row), double-buffered PE block,
    double-buffered folded table, and per-sequence compute temporaries.
    """
    Lp = -(-L // 8) * 8
    Dp = -(-D // 128) * 128
    V2p = -(-V2 // 8) * 8
    budget = vmem_limit // 2                           # headroom for internal scratch
    fixed = 2 * Lp * Dp * 4 + 2 * V2p * Dp * tab_itemsize
    per_seq = Lp * (2 * Dp * out_itemsize              # output tile (double-buffered)
                    + 2 * 128 * 4                      # lane-padded int32 tokens (x2 buffers)
                    + Dp * 4 + 128 * 2)                # f32 matmul result + bf16 one-hot temps
    nt = max(1, (budget - fixed) // per_seq)
    return int(max(1, min(nt, N, 64)))                 # cap unrolled per-sequence loop length


def msa_embedding(x, aa_idx, emb_table, pos_table, query_table, *,
                  n_tile=None, gather_dtype=jnp.bfloat16, out_dtype=jnp.float32):
    """x: (B, N, L) int tokens, aa_idx: (B, L) int residue indices.
    Returns (B, N, L, D) = emb[x] + pos_enc[aa_idx] + query_enc(seq != 0)."""
    B, N, L = x.shape
    V, D = emb_table.shape
    V2 = 2 * V

    # Fold the query-row embedding into the token table (wrapper-side, f32, then cast):
    #   rows [0, V)  -> emb + query_table[0]  (MSA query sequence, s == 0)
    #   rows [V, 2V) -> emb + query_table[1]  (all other sequences)
    tab = jnp.concatenate(
        [emb_table.astype(jnp.float32) + query_table[0].astype(jnp.float32),
         emb_table.astype(jnp.float32) + query_table[1].astype(jnp.float32)],
        axis=0).astype(gather_dtype)

    # Precompute the folded index in XLA (fuses into the cast); kernel needs no query logic.
    seq_off = (jnp.arange(N, dtype=jnp.int32) != 0).astype(jnp.int32) * V
    idx = (x.astype(jnp.int32) + seq_off[None, :, None]).reshape(B, N, L, 1)

    # Hoist the positional-encoding gather (depends only on (b, l)) to plain XLA indexing.
    pe = pos_table.astype(jnp.float32)[aa_idx.astype(jnp.int32)]    # (B, L, D)

    vmem_limit = _vmem_limit_bytes()
    out_itemsize = np.dtype(out_dtype).itemsize
    tab_itemsize = np.dtype(gather_dtype).itemsize
    if n_tile is None:
        n_tile = _choose_n_tile(N, L, D, V2, out_itemsize, tab_itemsize, vmem_limit)
    n_tile = int(max(1, min(n_tile, N)))
    s_tiles = pl.cdiv(N, n_tile)                       # ragged tail handled by Pallas clipping

    cost = pl.CostEstimate(
        flops=2 * B * N * L * V2 * D,                  # one-hot gather matmuls
        transcendentals=0,
        bytes_accessed=(B * N * L * D * out_itemsize   # output write-back (dominant)
                        + B * N * L * 4                # token indices
                        + B * L * D * 4                # positional-encoding rows
                        + V2 * D * tab_itemsize),      # folded table
    )

    return pl.pallas_call(
        msa_embedding_kernel,
        out_shape=jax.ShapeDtypeStruct((B, N, L, D), out_dtype),
        grid_spec=pltpu.PrefetchScalarGridSpec(
            num_scalar_prefetch=0,
            grid=(B, s_tiles),
            in_specs=[
                pl.BlockSpec((1, n_tile, L, 1), lambda b, s: (b, s, 0, 0)),  # folded tokens
                pl.BlockSpec((1, L, D), lambda b, s: (b, 0, 0)),             # PE (per batch)
                pl.BlockSpec((V2, D), lambda b, s: (0, 0)),                  # folded table
            ],
            out_specs=pl.BlockSpec((1, n_tile, L, D), lambda b, s: (b, s, 0, 0)),
        ),
        compiler_params=pltpu.CompilerParams(
            dimension_semantics=("parallel", "parallel"),   # no cross-iteration state left
            vmem_limit_bytes=vmem_limit,
        ),
        cost_estimate=cost,
    )(idx, pe, tab)


def make_sinusoidal_table(dim, max_len):
    # Mirrors SinusoidalPositionalEncoding.__init__ exactly.
    denom = jnp.exp(jnp.log(10000.0) * jnp.arange(0, dim, 2).astype(jnp.float32) / dim)
    pos = jnp.arange(0, max_len).astype(jnp.float32).reshape(-1, 1)
    pe = jnp.zeros((max_len, dim), jnp.float32)
    pe = pe.at[:, 0::2].set(jnp.sin(pos / denom))
    pe = pe.at[:, 1::2].set(jnp.cos(pos / denom))
    return pe


if __name__ == "__main__":
    key = jax.random.PRNGKey(0)
    # Deliberately awkward small shapes: L not a multiple of 8, N odd (ragged-tail path).
    B, N, L = 2, 9, 18               # batch, num MSA sequences, sequence length
    d_input, d_msa, max_len = 21, 128, 64

    k1, k2, k3, k4 = jax.random.split(key, 4)
    emb_table = jax.random.normal(k1, (d_input, d_msa), jnp.float32)   # nn.Embedding(21, d_msa)
    query_table = jax.random.normal(k2, (2, d_msa), jnp.float32)       # nn.Embedding(2, d_msa)
    pos_table = make_sinusoidal_table(d_msa, max_len)

    x = jax.random.randint(k3, (B, N, L), 0, d_input, dtype=jnp.int32)
    aa_idx = jax.random.randint(k4, (B, L), 0, max_len, dtype=jnp.int32)

    # Pure-JAX reference (same math as the PyTorch forward, dropout = identity).
    query_idx = jnp.ones((N,), jnp.int32).at[0].set(0)
    ref = (emb_table[x]                                  # (B, N, L, D)
           + pos_table[aa_idx][:, None, :, :]            # (B, 1, L, D)
           + query_table[query_idx][None, :, None, :])   # (1, N, 1, D)

    # 1) default path: auto n_tile, bf16 gather matmul, f32 output.
    out = jax.block_until_ready(msa_embedding(x, aa_idx, emb_table, pos_table, query_table))
    assert out.shape == (B, N, L, d_msa)
    assert jnp.allclose(out, ref, atol=5e-2), "mismatch vs reference (bf16 gather)"

    # 2) f32 gather, forced n_tile=4 so the grid has a ragged tail (cdiv(9,4)=3 tiles).
    out2 = jax.block_until_ready(
        msa_embedding(x, aa_idx, emb_table, pos_table, query_table,
                      n_tile=4, gather_dtype=jnp.float32))
    assert jnp.allclose(out2, ref, atol=1e-4), "mismatch vs reference (f32 gather, ragged tail)"

    # 3) bf16 output (halves HBM write-back), checked against the f32 reference.
    out3 = jax.block_until_ready(
        msa_embedding(x, aa_idx, emb_table, pos_table, query_table,
                      n_tile=4, out_dtype=jnp.bfloat16))
    assert out3.dtype == jnp.bfloat16
    assert jnp.allclose(out3.astype(jnp.float32), ref, atol=1e-1), "mismatch (bf16 output)"

    print("KERNEL_OK")
</pallas_src>

<mosaic_0001>
module attributes {stable_mosaic.version = 11 : i64} {
  func.func @msa_embedding_kernel(%arg0: i32, %arg1: i32, %arg2: memref<1x9x18x1xi32, #tpu.memory_space<vmem>>, %arg3: memref<1x18x128xf32, #tpu.memory_space<vmem>>, %arg4: memref<42x128xbf16, #tpu.memory_space<vmem>>, %arg5: memref<1x9x18x128xf32, #tpu.memory_space<vmem>>) attributes {dimension_semantics = [#tpu.dimension_semantics<parallel>, #tpu.dimension_semantics<parallel>], iteration_bounds = array<i64: 2, 1>, scalar_prefetch = 0 : i64, scratch_operands = 0 : i64, tpu.core_type = #tpu.core_type<tc>, window_params = [{transform_indices = @transform_0, window_bounds = array<i64: 1, 9, 18, 1>}, {transform_indices = @transform_1, window_bounds = array<i64: 1, 18, 128>}, {pipeline_mode = #tpu.pipeline_mode<synchronous>, transform_indices = @transform_2, window_bounds = array<i64: 42, 128>}, {transform_indices = @transform_3, window_bounds = array<i64: 1, 9, 18, 128>}]} {
    %c0 = arith.constant 0 : index
    %c0_0 = arith.constant 0 : index
    %c0_1 = arith.constant 0 : index
    %0 = vector.load %arg3[%c0, %c0_0, %c0_1] : memref<1x18x128xf32, #tpu.memory_space<vmem>>, vector<1x18x128xf32>
    %1 = vector.shape_cast %0 : vector<1x18x128xf32> to vector<18x128xf32>
    %c0_2 = arith.constant 0 : index
    %c0_3 = arith.constant 0 : index
    %2 = vector.load %arg4[%c0_2, %c0_3] : memref<42x128xbf16, #tpu.memory_space<vmem>>, vector<42x128xbf16>
    %3 = tpu.iota {dimensions = array<i32: 1>} : vector<18x42xi32>
    %c0_4 = arith.constant 0 : index
    %c0_5 = arith.constant 0 : index
    %c0_6 = arith.constant 0 : index
    %c0_7 = arith.constant 0 : index
    %4 = vector.load %arg2[%c0_4, %c0_5, %c0_6, %c0_7] : memref<1x9x18x1xi32, #tpu.memory_space<vmem>>, vector<1x1x18x1xi32>
    %5 = vector.shape_cast %4 : vector<1x1x18x1xi32> to vector<18x1xi32>
    %6 = vector.broadcast %5 : vector<18x1xi32> to vector<18x42xi32>
    %7 = arith.cmpi eq, %6, %3 : vector<18x42xi32>
    %8 = arith.extui %7 : vector<18x42xi1> to vector<18x42xi32>
    %9 = arith.sitofp %8 : vector<18x42xi32> to vector<18x42xf32>
    %10 = arith.truncf %9 : vector<18x42xf32> to vector<18x42xbf16>
    %cst = arith.constant dense<0.000000e+00> : vector<18x128xf32>
    %11 = tpu.matmul %10, %2, %cst {dimension_numbers = #tpu.dot_dimension_numbers<[1], [0], [0], [1], [0, 0, 1, 1], [], []>} : vector<18x42xbf16>, vector<42x128xbf16>, vector<18x128xf32> -> vector<18x128xf32>
    %12 = arith.addf %11, %1 : vector<18x128xf32>
    %c0_8 = arith.constant 0 : index
    %c0_9 = arith.constant 0 : index
    %c0_10 = arith.constant 0 : index
    %c0_11 = arith.constant 0 : index
    %13 = vector.load %arg5[%c0_8, %c0_9, %c0_10, %c0_11] : memref<1x9x18x128xf32, #tpu.memory_space<vmem>>, vector<1x1x18x128xf32>
    %14 = vector.shape_cast %13 : vector<1x1x18x128xf32> to vector<18x128xf32>
    %15 = vector.shape_cast %12 : vector<18x128xf32> to vector<1x1x18x128xf32>
    tpu.vector_store %arg5[%c0_8, %c0_9, %c0_10, %c0_11], %15 {strides = array<i32>} : memref<1x9x18x128xf32, #tpu.memory_space<vmem>>, vector<1x1x18x128xf32>,
    %c0_12 = arith.constant 0 : index
    %c1 = arith.constant 1 : index
    %c0_13 = arith.constant 0 : index
    %c0_14 = arith.constant 0 : index
    %16 = vector.load %arg2[%c0_12, %c1, %c0_13, %c0_14] : memref<1x9x18x1xi32, #tpu.memory_space<vmem>>, vector<1x1x18x1xi32>
    %17 = vector.shape_cast %16 : vector<1x1x18x1xi32> to vector<18x1xi32>
    %18 = vector.broadcast %17 : vector<18x1xi32> to vector<18x42xi32>
    %19 = arith.cmpi eq, %18, %3 : vector<18x42xi32>
    %20 = arith.extui %19 : vector<18x42xi1> to vector<18x42xi32>
    %21 = arith.sitofp %20 : vector<18x42xi32> to vector<18x42xf32>
    %22 = arith.truncf %21 : vector<18x42xf32> to vector<18x42xbf16>
    %cst_15 = arith.constant dense<0.000000e+00> : vector<18x128xf32>
    %23 = tpu.matmul %22, %2, %cst_15 {dimension_numbers = #tpu.dot_dimension_numbers<[1], [0], [0], [1], [0, 0, 1, 1], [], []>} : vector<18x42xbf16>, vector<42x128xbf16>, vector<18x128xf32> -> vector<18x128xf32>
    %24 = arith.addf %23, %1 : vector<18x128xf32>
    %c0_16 = arith.constant 0 : index
    %c1_17 = arith.constant 1 : index
    %c0_18 = arith.constant 0 : index
    %c0_19 = arith.constant 0 : index
    %25 = vector.load %arg5[%c0_16, %c1_17, %c0_18, %c0_19] : memref<1x9x18x128xf32, #tpu.memory_space<vmem>>, vector<1x1x18x128xf32>
    %26 = vector.shape_cast %25 : vector<1x1x18x128xf32> to vector<18x128xf32>
    %27 = vector.shape_cast %24 : vector<18x128xf32> to vector<1x1x18x128xf32>
    tpu.vector_store %arg5[%c0_16, %c1_17, %c0_18, %c0_19], %27 {strides = array<i32>} : memref<1x9x18x128xf32, #tpu.memory_space<vmem>>, vector<1x1x18x128xf32>,
    %c0_20 = arith.constant 0 : index
    %c2 = arith.constant 2 : index
    %c0_21 = arith.constant 0 : index
    %c0_22 = arith.constant 0 : index
    %28 = vector.load %arg2[%c0_20, %c2, %c0_21, %c0_22] : memref<1x9x18x1xi32, #tpu.memory_space<vmem>>, vector<1x1x18x1xi32>
    %29 = vector.shape_cast %28 : vector<1x1x18x1xi32> to vector<18x1xi32>
    %30 = vector.broadcast %29 : vector<18x1xi32> to vector<18x42xi32>
    %31 = arith.cmpi eq, %30, %3 : vector<18x42xi32>
    %32 = arith.extui %31 : vector<18x42xi1> to vector<18x42xi32>
    %33 = arith.sitofp %32 : vector<18x42xi32> to vector<18x42xf32>
    %34 = arith.truncf %33 : vector<18x42xf32> to vector<18x42xbf16>
    %cst_23 = arith.constant dense<0.000000e+00> : vector<18x128xf32>
    %35 = tpu.matmul %34, %2, %cst_23 {dimension_numbers = #tpu.dot_dimension_numbers<[1], [0], [0], [1], [0, 0, 1, 1], [], []>} : vector<18x42xbf16>, vector<42x128xbf16>, vector<18x128xf32> -> vector<18x128xf32>
    %36 = arith.addf %35, %1 : vector<18x128xf32>
    %c0_24 = arith.constant 0 : index
    %c2_25 = arith.constant 2 : index
    %c0_26 = arith.constant 0 : index
    %c0_27 = arith.constant 0 : index
    %37 = vector.load %arg5[%c0_24, %c2_25, %c0_26, %c0_27] : memref<1x9x18x128xf32, #tpu.memory_space<vmem>>, vector<1x1x18x128xf32>
    %38 = vector.shape_cast %37 : vector<1x1x18x128xf32> to vector<18x128xf32>
    %39 = vector.shape_cast %36 : vector<18x128xf32> to vector<1x1x18x128xf32>
    tpu.vector_store %arg5[%c0_24, %c2_25, %c0_26, %c0_27], %39 {strides = array<i32>} : memref<1x9x18x128xf32, #tpu.memory_space<vmem>>, vector<1x1x18x128xf32>,
    %c0_28 = arith.constant 0 : index
    %c3 = arith.constant 3 : index
    %c0_29 = arith.constant 0 : index
    %c0_30 = arith.constant 0 : index
    %40 = vector.load %arg2[%c0_28, %c3, %c0_29, %c0_30] : memref<1x9x18x1xi32, #tpu.memory_space<vmem>>, vector<1x1x18x1xi32>
    %41 = vector.shape_cast %40 : vector<1x1x18x1xi32> to vector<18x1xi32>
    %42 = vector.broadcast %41 : vector<18x1xi32> to vector<18x42xi32>
    %43 = arith.cmpi eq, %42, %3 : vector<18x42xi32>
    %44 = arith.extui %43 : vector<18x42xi1> to vector<18x42xi32>
    %45 = arith.sitofp %44 : vector<18x42xi32> to vector<18x42xf32>
    %46 = arith.truncf %45 : vector<18x42xf32> to vector<18x42xbf16>
    %cst_31 = arith.constant dense<0.000000e+00> : vector<18x128xf32>
    %47 = tpu.matmul %46, %2, %cst_31 {dimension_numbers = #tpu.dot_dimension_numbers<[1], [0], [0], [1], [0, 0, 1, 1], [], []>} : vector<18x42xbf16>, vector<42x128xbf16>, vector<18x128xf32> -> vector<18x128xf32>
    %48 = arith.addf %47, %1 : vector<18x128xf32>
    %c0_32 = arith.constant 0 : index
    %c3_33 = arith.constant 3 : index
    %c0_34 = arith.constant 0 : index
    %c0_35 = arith.constant 0 : index
    %49 = vector.load %arg5[%c0_32, %c3_33, %c0_34, %c0_35] : memref<1x9x18x128xf32, #tpu.memory_space<vmem>>, vector<1x1x18x128xf32>
    %50 = vector.shape_cast %49 : vector<1x1x18x128xf32> to vector<18x128xf32>
    %51 = vector.shape_cast %48 : vector<18x128xf32> to vector<1x1x18x128xf32>
    tpu.vector_store %arg5[%c0_32, %c3_33, %c0_34, %c0_35], %51 {strides = array<i32>} : memref<1x9x18x128xf32, #tpu.memory_space<vmem>>, vector<1x1x18x128xf32>,
    %c0_36 = arith.constant 0 : index
    %c4 = arith.constant 4 : index
    %c0_37 = arith.constant 0 : index
    %c0_38 = arith.constant 0 : index
    %52 = vector.load %arg2[%c0_36, %c4, %c0_37, %c0_38] : memref<1x9x18x1xi32, #tpu.memory_space<vmem>>, vector<1x1x18x1xi32>
    %53 = vector.shape_cast %52 : vector<1x1x18x1xi32> to vector<18x1xi32>
    %54 = vector.broadcast %53 : vector<18x1xi32> to vector<18x42xi32>
    %55 = arith.cmpi eq, %54, %3 : vector<18x42xi32>
    %56 = arith.extui %55 : vector<18x42xi1> to vector<18x42xi32>
    %57 = arith.sitofp %56 : vector<18x42xi32> to vector<18x42xf32>
    %58 = arith.truncf %57 : vector<18x42xf32> to vector<18x42xbf16>
    %cst_39 = arith.constant dense<0.000000e+00> : vector<18x128xf32>
    %59 = tpu.matmul %58, %2, %cst_39 {dimension_numbers = #tpu.dot_dimension_numbers<[1], [0], [0], [1], [0, 0, 1, 1], [], []>} : vector<18x42xbf16>, vector<42x128xbf16>, vector<18x128xf32> -> vector<18x128xf32>
    %60 = arith.addf %59, %1 : vector<18x128xf32>
    %c0_40 = arith.constant 0 : index
    %c4_41 = arith.constant 4 : index
    %c0_42 = arith.constant 0 : index
    %c0_43 = arith.constant 0 : index
    %61 = vector.load %arg5[%c0_40, %c4_41, %c0_42, %c0_43] : memref<1x9x18x128xf32, #tpu.memory_space<vmem>>, vector<1x1x18x128xf32>
    %62 = vector.shape_cast %61 : vector<1x1x18x128xf32> to vector<18x128xf32>
    %63 = vector.shape_cast %60 : vector<18x128xf32> to vector<1x1x18x128xf32>
    tpu.vector_store %arg5[%c0_40, %c4_41, %c0_42, %c0_43], %63 {strides = array<i32>} : memref<1x9x18x128xf32, #tpu.memory_space<vmem>>, vector<1x1x18x128xf32>,
    %c0_44 = arith.constant 0 : index
    %c5 = arith.constant 5 : index
    %c0_45 = arith.constant 0 : index
    %c0_46 = arith.constant 0 : index
    %64 = vector.load %arg2[%c0_44, %c5, %c0_45, %c0_46] : memref<1x9x18x1xi32, #tpu.memory_space<vmem>>, vector<1x1x18x1xi32>
    %65 = vector.shape_cast %64 : vector<1x1x18x1xi32> to vector<18x1xi32>
    %66 = vector.broadcast %65 : vector<18x1xi32> to vector<18x42xi32>
    %67 = arith.cmpi eq, %66, %3 : vector<18x42xi32>
    %68 = arith.extui %67 : vector<18x42xi1> to vector<18x42xi32>
    %69 = arith.sitofp %68 : vector<18x42xi32> to vector<18x42xf32>
    %70 = arith.truncf %69 : vector<18x42xf32> to vector<18x42xbf16>
    %cst_47 = arith.constant dense<0.000000e+00> : vector<18x128xf32>
    %71 = tpu.matmul %70, %2, %cst_47 {dimension_numbers = #tpu.dot_dimension_numbers<[1], [0], [0], [1], [0, 0, 1, 1], [], []>} : vector<18x42xbf16>, vector<42x128xbf16>, vector<18x128xf32> -> vector<18x128xf32>
    %72 = arith.addf %71, %1 : vector<18x128xf32>
    %c0_48 = arith.constant 0 : index
    %c5_49 = arith.constant 5 : index
    %c0_50 = arith.constant 0 : index
    %c0_51 = arith.constant 0 : index
    %73 = vector.load %arg5[%c0_48, %c5_49, %c0_50, %c0_51] : memref<1x9x18x128xf32, #tpu.memory_space<vmem>>, vector<1x1x18x128xf32>
    %74 = vector.shape_cast %73 : vector<1x1x18x128xf32> to vector<18x128xf32>
    %75 = vector.shape_cast %72 : vector<18x128xf32> to vector<1x1x18x128xf32>
    tpu.vector_store %arg5[%c0_48, %c5_49, %c0_50, %c0_51], %75 {strides = array<i32>} : memref<1x9x18x128xf32, #tpu.memory_space<vmem>>, vector<1x1x18x128xf32>,
    %c0_52 = arith.constant 0 : index
    %c6 = arith.constant 6 : index
    %c0_53 = arith.constant 0 : index
    %c0_54 = arith.constant 0 : index
    %76 = vector.load %arg2[%c0_52, %c6, %c0_53, %c0_54] : memref<1x9x18x1xi32, #tpu.memory_space<vmem>>, vector<1x1x18x1xi32>
    %77 = vector.shape_cast %76 : vector<1x1x18x1xi32> to vector<18x1xi32>
    %78 = vector.broadcast %77 : vector<18x1xi32> to vector<18x42xi32>
    %79 = arith.cmpi eq, %78, %3 : vector<18x42xi32>
    %80 = arith.extui %79 : vector<18x42xi1> to vector<18x42xi32>
    %81 = arith.sitofp %80 : vector<18x42xi32> to vector<18x42xf32>
    %82 = arith.truncf %81 : vector<18x42xf32> to vector<18x42xbf16>
    %cst_55 = arith.constant dense<0.000000e+00> : vector<18x128xf32>
    %83 = tpu.matmul %82, %2, %cst_55 {dimension_numbers = #tpu.dot_dimension_numbers<[1], [0], [0], [1], [0, 0, 1, 1], [], []>} : vector<18x42xbf16>, vector<42x128xbf16>, vector<18x128xf32> -> vector<18x128xf32>
    %84 = arith.addf %83, %1 : vector<18x128xf32>
    %c0_56 = arith.constant 0 : index
    %c6_57 = arith.constant 6 : index
    %c0_58 = arith.constant 0 : index
    %c0_59 = arith.constant 0 : index
    %85 = vector.load %arg5[%c0_56, %c6_57, %c0_58, %c0_59] : memref<1x9x18x128xf32, #tpu.memory_space<vmem>>, vector<1x1x18x128xf32>
    %86 = vector.shape_cast %85 : vector<1x1x18x128xf32> to vector<18x128xf32>
    %87 = vector.shape_cast %84 : vector<18x128xf32> to vector<1x1x18x128xf32>
    tpu.vector_store %arg5[%c0_56, %c6_57, %c0_58, %c0_59], %87 {strides = array<i32>} : memref<1x9x18x128xf32, #tpu.memory_space<vmem>>, vector<1x1x18x128xf32>,
    %c0_60 = arith.constant 0 : index
    %c7 = arith.constant 7 : index
    %c0_61 = arith.constant 0 : index
    %c0_62 = arith.constant 0 : index
    %88 = vector.load %arg2[%c0_60, %c7, %c0_61, %c0_62] : memref<1x9x18x1xi32, #tpu.memory_space<vmem>>, vector<1x1x18x1xi32>
    %89 = vector.shape_cast %88 : vector<1x1x18x1xi32> to vector<18x1xi32>
    %90 = vector.broadcast %89 : vector<18x1xi32> to vector<18x42xi32>
    %91 = arith.cmpi eq, %90, %3 : vector<18x42xi32>
    %92 = arith.extui %91 : vector<18x42xi1> to vector<18x42xi32>
    %93 = arith.sitofp %92 : vector<18x42xi32> to vector<18x42xf32>
    %94 = arith.truncf %93 : vector<18x42xf32> to vector<18x42xbf16>
    %cst_63 = arith.constant dense<0.000000e+00> : vector<18x128xf32>
    %95 = tpu.matmul %94, %2, %cst_63 {dimension_numbers = #tpu.dot_dimension_numbers<[1], [0], [0], [1], [0, 0, 1, 1], [], []>} : vector<18x42xbf16>, vector<42x128xbf16>, vector<18x128xf32> -> vector<18x128xf32>
    %96 = arith.addf %95, %1 : vector<18x128xf32>
    %c0_64 = arith.constant 0 : index
    %c7_65 = arith.constant 7 : index
    %c0_66 = arith.constant 0 : index
    %c0_67 = arith.constant 0 : index
    %97 = vector.load %arg5[%c0_64, %c7_65, %c0_66, %c0_67] : memref<1x9x18x128xf32, #tpu.memory_space<vmem>>, vector<1x1x18x128xf32>
    %98 = vector.shape_cast %97 : vector<1x1x18x128xf32> to vector<18x128xf32>
    %99 = vector.shape_cast %96 : vector<18x128xf32> to vector<1x1x18x128xf32>
    tpu.vector_store %arg5[%c0_64, %c7_65, %c0_66, %c0_67], %99 {strides = array<i32>} : memref<1x9x18x128xf32, #tpu.memory_space<vmem>>, vector<1x1x18x128xf32>,
    %c0_68 = arith.constant 0 : index
    %c8 = arith.constant 8 : index
    %c0_69 = arith.constant 0 : index
    %c0_70 = arith.constant 0 : index
    %100 = vector.load %arg2[%c0_68, %c8, %c0_69, %c0_70] : memref<1x9x18x1xi32, #tpu.memory_space<vmem>>, vector<1x1x18x1xi32>
    %101 = vector.shape_cast %100 : vector<1x1x18x1xi32> to vector<18x1xi32>
    %102 = vector.broadcast %101 : vector<18x1xi32> to vector<18x42xi32>
    %103 = arith.cmpi eq, %102, %3 : vector<18x42xi32>
    %104 = arith.extui %103 : vector<18x42xi1> to vector<18x42xi32>
    %105 = arith.sitofp %104 : vector<18x42xi32> to vector<18x42xf32>
    %106 = arith.truncf %105 : vector<18x42xf32> to vector<18x42xbf16>
    %cst_71 = arith.constant dense<0.000000e+00> : vector<18x128xf32>
    %107 = tpu.matmul %106, %2, %cst_71 {dimension_numbers = #tpu.dot_dimension_numbers<[1], [0], [0], [1], [0, 0, 1, 1], [], []>} : vector<18x42xbf16>, vector<42x128xbf16>, vector<18x128xf32> -> vector<18x128xf32>
    %108 = arith.addf %107, %1 : vector<18x128xf32>
    %c0_72 = arith.constant 0 : index
    %c8_73 = arith.constant 8 : index
    %c0_74 = arith.constant 0 : index
    %c0_75 = arith.constant 0 : index
    %109 = vector.load %arg5[%c0_72, %c8_73, %c0_74, %c0_75] : memref<1x9x18x128xf32, #tpu.memory_space<vmem>>, vector<1x1x18x128xf32>
    %110 = vector.shape_cast %109 : vector<1x1x18x128xf32> to vector<18x128xf32>
    %111 = vector.shape_cast %108 : vector<18x128xf32> to vector<1x1x18x128xf32>
    tpu.vector_store %arg5[%c0_72, %c8_73, %c0_74, %c0_75], %111 {strides = array<i32>} : memref<1x9x18x128xf32, #tpu.memory_space<vmem>>, vector<1x1x18x128xf32>,
    return
  }
  func.func @transform_0(%arg0: i32, %arg1: i32) -> (i32, i32, i32, i32) {
    %c0_i32 = arith.constant 0 : i32
    %c0_i32_0 = arith.constant 0 : i32
    %c0_i32_1 = arith.constant 0 : i32
    return %arg0, %arg1, %c0_i32, %c0_i32_0 : i32, i32, i32, i32
  }
  func.func @transform_1(%arg0: i32, %arg1: i32) -> (i32, i32, i32) {
    %c0_i32 = arith.constant 0 : i32
    %c0_i32_0 = arith.constant 0 : i32
    %c0_i32_1 = arith.constant 0 : i32
    return %arg0, %c0_i32, %c0_i32_0 : i32, i32, i32
  }
  func.func @transform_2(%arg0: i32, %arg1: i32) -> (i32, i32) {
    %c0_i32 = arith.constant 0 : i32
    %c0_i32_0 = arith.constant 0 : i32
    %c0_i32_1 = arith.constant 0 : i32
    return %c0_i32, %c0_i32_0 : i32, i32
  }
  func.func @transform_3(%arg0: i32, %arg1: i32) -> (i32, i32, i32, i32) {
    %c0_i32 = arith.constant 0 : i32
    %c0_i32_0 = arith.constant 0 : i32
    %c0_i32_1 = arith.constant 0 : i32
    return %arg0, %arg1, %c0_i32, %c0_i32_0 : i32, i32, i32, i32
  }
}

</mosaic_0001>

<llo_original>
// kernel: tpu_custom_call.1
$region0: #{tpu_custom_call.1}
  #allocation0 [shape = 'u32[]', space=smem, size = 0x4, offset = 0x4, fixed_abs, tag = 'smem constant byte address 0x4 - core index']
  #allocation1 [shape = 'u32[72,128]{1,0:T(1,128)}', space=vmem, size = 0x9000, scoped, tag = 'internal scratch']
  %s0 = inlined_call_operand.vmem [shape: s32[2,9,18,1], index: 0, kind: input, shape index: {}]
  %s1 = inlined_call_operand.vmem [shape: f32[2,18,128], index: 1, kind: input, shape index: {}]
  %s2 = inlined_call_operand.vmem [shape: bf16[42,128], index: 2, kind: input, shape index: {}]
  %s3 = inlined_call_operand.vmem [shape: f32[2,9,18,128], index: 3, kind: output, shape index: {}]
  %s4 = sld [smem:[#allocation0]]
  $region45: #{tpu_custom_call.1} parent=0
    _
  %s6 = ssub.s32 1, %s4
  %s7 = scalar_select 0, %s6, %s4
  loop: start=0, step=1, limit=4
  $region2: #{tpu_custom_call.1} parent=0 // loop_pre_header
    _
  $region3: #{tpu_custom_call.1} parent=0 // loop_header
    %s9 = sphi 0, %s13
    %p10 = scmp.ge.s32.totalorder %s9, 4
    %s16 = sphi 0, %s28
    %s17 = sphi 0, %s24
    %s18 = sphi 0, %s16
    %s19 = sphi 0, %s17
    %s20 = sphi 0, %s18
    %s21 = sphi 0, %s19
    %s33 = sphi 0, %s35
    %s36 = sphi 0, %s33
    %s37 = sphi 0, %s36
    %s53 = sphi 0, %s37
    %s59 = sphi 0, %s61
    %s62 = sphi 0, %s59
    %s63 = sphi 0, %s62
    %s79 = sphi 0, %s63
    %s83 = sphi 0, %s83
    %s85 = sphi 0, %s83
    %s86 = sphi 0, %s85
    %s100 = sphi 0, %s86
    %s108 = sphi 0, %s110
    %s111 = sphi 0, %s108
    %s112 = sphi 0, %s111
    %s128 = sphi 0, %s112
  $region4: #{tpu_custom_call.1} parent=0 // loop_header_branch
    %12 = sbr.rel (%p10) target = $region8
  $region5: #{tpu_custom_call.1} parent=0 // loop_body
    %s14 = ssub.s32 %s9, 1
    %s15 = ssub.s32 %s9, 2
    %s22 = sadd.s32 1, %s17
    %p23 = scmp.ge.s32.totalorder %s22, 1
    %s24 = scalar_select %p23, 0, %s22
    %s25 = sadd.s32 1, %s16
    %s26 = scalar_select %p23, %s25, %s16
    %p27 = scmp.ge.s32.totalorder %s26, 2
    %s28 = scalar_select %p27, 0, %s26
    %s29 = ssub.s32 %s16, %s28
    %s30 = ssub.s32 %s17, %s24
    %s31 = sor.u32 %s29, %s30
    %p32 = scmp.eq.s32.totalorder %s31, 0
    %s34 = sadd.s32 %s33, 1
    %s35 = scalar_select %p32, %s33, %s34
    %p38 = pneg %p32
    %p39 = scmp.eq.s32.totalorder %s9, 1
    %p40 = por %p38, %p39
    %p41 = scmp.ne.s32.totalorder %s33, %s36
    %p42 = scmp.eq.s32.totalorder %s9, 0
    %p43 = por %p41, %p42
    %p44 = scmp.ne.s32.totalorder %s33, %s36
    %p45 = scmp.eq.s32.totalorder %s14, 1
    %p46 = por %p44, %p45
    %p47 = scmp.ne.s32.totalorder %s36, %s37
    %p48 = scmp.eq.s32.totalorder %s14, 0
    %p49 = por %p47, %p48
    %p50 = scmp.ne.s32.totalorder %s36, %s37
    %p51 = scmp.eq.s32.totalorder %s15, 1
    %p52 = por %p50, %p51
    %p54 = scmp.ne.s32.totalorder %s37, %s53
    %p55 = scmp.eq.s32.totalorder %s15, 0
    %p56 = por %p54, %p55
    %s57 = ssub.s32 %s16, %s28
    %p58 = scmp.eq.s32.totalorder %s57, 0
    %s60 = sadd.s32 %s59, 1
    %s61 = scalar_select %p58, %s59, %s60
    %p64 = pneg %p58
    %p65 = scmp.eq.s32.totalorder %s9, 1
    %p66 = por %p64, %p65
    %p67 = scmp.ne.s32.totalorder %s59, %s62
    %p68 = scmp.eq.s32.totalorder %s9, 0
    %p69 = por %p67, %p68
    %p70 = scmp.ne.s32.totalorder %s59, %s62
    %p71 = scmp.eq.s32.totalorder %s14, 1
    %p72 = por %p70, %p71
    %p73 = scmp.ne.s32.totalorder %s62, %s63
    %p74 = scmp.eq.s32.totalorder %s14, 0
    %p75 = por %p73, %p74
    %p76 = scmp.ne.s32.totalorder %s62, %s63
    %p77 = scmp.eq.s32.totalorder %s15, 1
    %p78 = por %p76, %p77
    %p80 = scmp.ne.s32.totalorder %s63, %s79
    %p81 = scmp.eq.s32.totalorder %s15, 0
    %p82 = por %p80, %p81
    %s84 = sadd.s32 %s83, 1
    %p87 = scmp.eq.s32.totalorder %s9, 1
    %p88 = scmp.ne.s32.totalorder %s83, %s85
    %p89 = scmp.eq.s32.totalorder %s9, 0
    %p90 = por %p88, %p89
    %p91 = scmp.ne.s32.totalorder %s83, %s85
    %p92 = scmp.eq.s32.totalorder %s14, 1
    %p93 = por %p91, %p92
    %p94 = scmp.ne.s32.totalorder %s85, %s86
    %p95 = scmp.eq.s32.totalorder %s14, 0
    %p96 = por %p94, %p95
    %p97 = scmp.ne.s32.totalorder %s85, %s86
    %p98 = scmp.eq.s32.totalorder %s15, 1
    %p99 = por %p97, %p98
    %p101 = scmp.ne.s32.totalorder %s86, %s100
    %p102 = scmp.eq.s32.totalorder %s15, 0
    %p103 = por %p101, %p102
    %s104 = ssub.s32 %s16, %s28
    %s105 = ssub.s32 %s17, %s24
    %s106 = sor.u32 %s104, %s105
    %p107 = scmp.eq.s32.totalorder %s106, 0
    %s109 = sadd.s32 %s108, 1
    %s110 = scalar_select %p107, %s108, %s109
    %p113 = pneg %p107
    %p114 = scmp.eq.s32.totalorder %s9, 1
    %p115 = por %p113, %p114
    %p116 = scmp.ne.s32.totalorder %s108, %s111
    %p117 = scmp.eq.s32.totalorder %s9, 0
    %p118 = por %p116, %p117
    %p119 = scmp.ne.s32.totalorder %s108, %s111
    %p120 = scmp.eq.s32.totalorder %s14, 1
    %p121 = por %p119, %p120
    %p122 = scmp.ne.s32.totalorder %s111, %s112
    %p123 = scmp.eq.s32.totalorder %s14, 0
    %p124 = por %p122, %p123
    %p125 = scmp.ne.s32.totalorder %s111, %s112
    %p126 = scmp.eq.s32.totalorder %s15, 1
    %p127 = por %p125, %p126
    %p129 = scmp.ne.s32.totalorder %s112, %s128
    %p130 = scmp.eq.s32.totalorder %s15, 0
    %p131 = por %p129, %p130
    %p132 = scmp.le.s32.totalorder 1, %s9
    %p133 = scmp.lt.s32.totalorder %s9, 3
    %p134 = pnand %p132, %p133
    %p135 = pneg %p134
    // Predicated region
    $region9: #{tpu_custom_call.1} parent=5 // pred_check
      _
    $region10: #{tpu_custom_call.1} parent=5 // pred_check_branch
      %137 = sbr.rel (%p134) target = $region12
    $region11: #{tpu_custom_call.1} parent=5 // pred_region
      %s138 = ssub.s32 %s9, 1
      // Predicated region
      $region13: #{tpu_custom_call.1} parent=11 // pred_check
        %p139 = pneg %p96
      $region14: #{tpu_custom_call.1} parent=11 // pred_check_branch
        %141 = sbr.rel (%p139) target = $region16
      $region15: #{tpu_custom_call.1} parent=11 // pred_region
        _
      $region16: #{tpu_custom_call.1} parent=11 // pred_fallthru
        _
    $region12: #{tpu_custom_call.1} parent=5 // pred_fallthru
      _
    %p142 = scmp.lt.s32.totalorder %s9, 2
    // Predicated region
    $region17: #{tpu_custom_call.1} parent=5 // pred_check
      %p143 = pneg %p142
    $region18: #{tpu_custom_call.1} parent=5 // pred_check_branch
      %145 = sbr.rel (%p143) target = $region20
    $region19: #{tpu_custom_call.1} parent=5 // pred_region
      // Predicated region
      $region21: #{tpu_custom_call.1} parent=19 // pred_check
        %p146 = pneg %p43
      $region22: #{tpu_custom_call.1} parent=19 // pred_check_branch
        %148 = sbr.rel (%p146) target = $region24
      $region23: #{tpu_custom_call.1} parent=19 // pred_region
        %s149 = smul.u32 9, %s17
        %p150 = scmp.lt.s32.totalorder %s16, 1
        %s151 = scalar_select %p150, %s16, 1
        %p152 = scmp.lt.s32.totalorder %s149, 8
        %s153 = scalar_select %p152, %s149, 8
        %s154 = smul.addr %s153, 3
        %s155 = smul.addr %s151, 27
        %s156 = sadd.s32 %s154, %s155
        %s157 = smul.addr %s156, 8
        %s158 = scalar_lea.vmem %s0, %s157
        %s159 = smul.u32 9, %s17
      $region24: #{tpu_custom_call.1} parent=19 // pred_fallthru
        _
      // Predicated region
      $region25: #{tpu_custom_call.1} parent=19 // pred_check
        %p160 = pneg %p69
      $region26: #{tpu_custom_call.1} parent=19 // pred_check_branch
        %162 = sbr.rel (%p160) target = $region28
      $region27: #{tpu_custom_call.1} parent=19 // pred_region
        %p163 = scmp.lt.s32.totalorder %s16, 1
        %s164 = scalar_select %p163, %s16, 1
        %s165 = smul.addr %s164, 3
        %s166 = smul.addr %s165, 8
        %s167 = scalar_lea.vmem %s1, %s166
      $region28: #{tpu_custom_call.1} parent=19 // pred_fallthru
        _
    $region20: #{tpu_custom_call.1} parent=5 // pred_fallthru
      _
    %p168 = scmp.le.s32.totalorder 1, %s9
    %p169 = scmp.lt.s32.totalorder %s9, 3
    %p170 = pnand %p168, %p169
    %p171 = pneg %p170
    // Predicated region
    $region29: #{tpu_custom_call.1} parent=5 // pred_check
      _
    $region30: #{tpu_custom_call.1} parent=5 // pred_check_branch
      %173 = sbr.rel (%p170) target = $region32
    $region31: #{tpu_custom_call.1} parent=5 // pred_region
      %s174 = ssub.s32 %s9, 1
      %s175 = smul.u32 9, %s19
      %p176 = scmp.lt.s32.totalorder %s18, 1
      %s177 = scalar_select %p176, %s18, 1
      %p178 = scmp.lt.s32.totalorder %s175, 8
      %s179 = scalar_select %p178, %s175, 8
      %s180 = smul.addr %s179, 3
      %s181 = smul.addr %s177, 27
      %s182 = sadd.s32 %s180, %s181
      %s183 = smul.addr %s182, 8
      %s184 = scalar_lea.vmem %s0, %s183
      %p185 = pneg %p49
      %p186 = pneg %p46
      %p187 = scmp.lt.s32.totalorder %s18, 1
      %s188 = scalar_select %p187, %s18, 1
      %s189 = smul.addr %s188, 3
      %s190 = smul.addr %s189, 8
      %s191 = scalar_lea.vmem %s1, %s190
      %p192 = pneg %p75
      %p193 = pneg %p72
      %p194 = pneg %p96
      %p195 = pneg %p93
      %p196 = pneg %p124
      %p197 = pneg %p121
      %s198 = smul.u32 9, %s19
      %p199 = scmp.lt.s32.totalorder %s18, 1
      %s200 = scalar_select %p199, %s18, 1
      %p201 = scmp.lt.s32.totalorder %s198, 8
      %s202 = scalar_select %p201, %s198, 8
      %s203 = smul.addr %s202, 3
      %s204 = smul.addr %s200, 27
      %s205 = sadd.s32 %s203, %s204
      %s206 = smul.addr %s205, 8
      %s207 = scalar_lea.vmem %s3, %s206
      %s208 = smul.u32 9, %s19
      %p209 = scmp.lt.s32.totalorder %s18, 1
      %s210 = scalar_select %p209, %s18, 1
      %p211 = scmp.lt.s32.totalorder %s208, 8
      %s212 = scalar_select %p211, %s208, 8
      %s213 = smul.addr %s212, 3
      %s214 = smul.addr %s210, 27
      %s215 = sadd.s32 %s213, %s214
      %s216 = smul.addr %s215, 8
      %s217 = scalar_lea.vmem %s0, %s216
      %s218 = smul.u32 9, %s19
      %p219 = scmp.lt.s32.totalorder %s18, 1
      %s220 = scalar_select %p219, %s18, 1
      %s221 = smul.addr %s220, 3
      %s222 = smul.addr %s221, 8
      %s223 = scalar_lea.vmem %s1, %s222
      %s224 = smul.u32 9, %s19
      %p225 = scmp.lt.s32.totalorder %s18, 1
      %s226 = scalar_select %p225, %s18, 1
      %p227 = scmp.lt.s32.totalorder %s224, 8
      %s228 = scalar_select %p227, %s224, 8
      %s229 = smul.addr %s228, 3
      %s230 = smul.addr %s226, 27
      %s231 = sadd.s32 %s229, %s230
      %s232 = smul.addr %s231, 8
      %s233 = scalar_lea.vmem %s3, %s232
      %s234 = smul.u32 9, %s19
      %v236 = vld [vmem:[%s223] sm:$0xff]
      %v237 = vld [vmem:[%s223 + $0x8] sm:$0xff]
      %v238 = vld [vmem:[%s223 + $0x10] sm:$0x3]
      %v239 = vld [vmem:[%s2] sm:$0xf]
      %v240 = vld [vmem:[%s2 + $0x4] sm:$0xf]
      %v241 = vld [vmem:[%s2 + $0x8] sm:$0xf]
      %v242 = vld [vmem:[%s2 + $0xc] sm:$0xf]
      %v243 = vld [vmem:[%s2 + $0x10] sm:$0xf]
      %v244 = vld [vmem:[%s2 + $0x14] sm:$0x1]
      %v245 = vlaneseq
      %v246 = vand.u32 %v245, 127
      %v247 = vld [vmem:[%s217] sm:$0xff]
      %v248 = vld [vmem:[%s217 + $0x8] sm:$0xff]
      %v249 = vld [vmem:[%s217 + $0x10] sm:$0x3]
      %250 = vset.pattern.permute.xlu0 0
      %251 = vperm.xlu0 %250, %v247
      %v252 = vpop.permute.xlu0 %251
      %253 = vset.pattern.permute.xlu0 0
      %254 = vperm.xlu0 %253, %v248
      %v255 = vpop.permute.xlu0 %254
      %256 = vset.pattern.permute.xlu0 0
      %257 = vperm.xlu0 %256, %v249
      %v258 = vpop.permute.xlu0 %257
      %vm259 = vcmp.eq.s32.totalorder %v252, %v246
      %vm260 = vcmp.eq.s32.totalorder %v255, %v246
      %vm261 = vcmp.eq.s32.totalorder %v258, %v246
      %v262 = vsel %vm259, 1, 0
      %v263 = vsel %vm260, 1, 0
      %v264 = vsel %vm261, 1, 0
      %v265 = vcvt.s32.f32 %v262
      %v266 = vcvt.s32.f32 %v263
      %v267 = vcvt.s32.f32 %v264
      %v268 = vpack.c.bf16 %v266, %v265
      %v269 = vpack.c.bf16 %v267, %v267
      %v276 = vunpack.c.l.b16 %v239
      %v277 = vunpack.c.l.b16 %v240
      %v278 = vunpack.c.l.b16 %v241
      %v279 = vunpack.c.l.b16 %v242
      %v280 = vunpack.c.l.b16 %v243
      %v281 = vunpack.c.l.b16 %v244
      %v282 = vpack.c.b16 %v277, %v276
      %v283 = vpack.c.b16 %v279, %v278
      %v284 = vpack.c.b16 %v281, %v280
      %vm287 = vcmask 343040
      %v289 = vsel %vm287, %v268, 0
      %v292 = vsel %vm287, %v269, 0
      %vm294 = vcmask 1044480
      %v296 = vsel %vm294, %v284, 0
      %298 = vmatpush.bf16.msra.mxu0 0
      %299 = vmatpush.bf16.msra.mxu0 0
      %300 = vmatpush.bf16.msra.mxu0 0
      %301 = vmatpush.bf16.msra.mxu0 0
      %302 = vmatpush.bf16.msra.mxu0 0
      %303 = vmatpush.bf16.msra.mxu0 %v296
      %304 = vmatpush.bf16.msra.mxu0 %v283
      %305 = vmatpush.bf16.msra.mxu0 %v282
      %306 = vmatmul.bf16.gmra.mxu0 %v289
      %v307 = vpop.f32.mrf.mxu0
      %v308 = vadd.f32 %v236, %v307
      %v309 = vpop.f32.mrf.mxu0
      %v310 = vadd.f32 %v237, %v309
      %311 = vmatmul.bf16.gmra.mxu0 %v292
      %v312 = vpop.f32.mrf.mxu0
      %v313 = vadd.f32 %v238, %v312
      %v314 = vpop.f32.mrf.mxu0
      %315 = vdwg.mxu0
      %316 = vst [vmem:[%s233] sm:$0xff] %v308
      %317 = vst [vmem:[%s233 + $0x8] sm:$0xff] %v310
      %318 = vst [vmem:[%s233 + $0x10] sm:$0x3] %v313
      %s319 = scalar_lea.vmem %s217, 24
      %v320 = vld [vmem:[%s319] sm:$0xff]
      %v321 = vld [vmem:[%s319 + $0x8] sm:$0xff]
      %v322 = vld [vmem:[%s319 + $0x10] sm:$0x3]
      %323 = vset.pattern.permute.xlu0 0
      %324 = vperm.xlu0 %323, %v320
      %v325 = vpop.permute.xlu0 %324
      %326 = vset.pattern.permute.xlu0 0
      %327 = vperm.xlu0 %326, %v321
      %v328 = vpop.permute.xlu0 %327
      %329 = vset.pattern.permute.xlu0 0
      %330 = vperm.xlu0 %329, %v322
      %v331 = vpop.permute.xlu0 %330
      %vm332 = vcmp.eq.s32.totalorder %v325, %v246
      %vm333 = vcmp.eq.s32.totalorder %v328, %v246
      %vm334 = vcmp.eq.s32.totalorder %v331, %v246
      %v335 = vsel %vm332, 1, 0
      %v336 = vsel %vm333, 1, 0
      %v337 = vsel %vm334, 1, 0
      %v338 = vcvt.s32.f32 %v335
      %v339 = vcvt.s32.f32 %v336
      %v340 = vcvt.s32.f32 %v337
      %v341 = vpack.c.bf16 %v339, %v338
      %v342 = vpack.c.bf16 %v340, %v340
      %v344 = vsel %vm287, %v341, 0
      %v347 = vsel %vm287, %v342, 0
      %349 = vmatpush.bf16.msra.mxu0 0
      %350 = vmatpush.bf16.msra.mxu0 0
      %351 = vmatpush.bf16.msra.mxu0 0
      %352 = vmatpush.bf16.msra.mxu0 0
      %353 = vmatpush.bf16.msra.mxu0 0
      %354 = vmatpush.bf16.msra.mxu0 %v296
      %355 = vmatpush.bf16.msra.mxu0 %v283
      %356 = vmatpush.bf16.msra.mxu0 %v282
      %357 = vmatmul.bf16.gmra.mxu0 %v344
      %v358 = vpop.f32.mrf.mxu0
      %v359 = vadd.f32 %v236, %v358
      %v360 = vpop.f32.mrf.mxu0
      %v361 = vadd.f32 %v237, %v360
      %362 = vmatmul.bf16.gmra.mxu0 %v347
      %v363 = vpop.f32.mrf.mxu0
      %v364 = vadd.f32 %v238, %v363
      %v365 = vpop.f32.mrf.mxu0
      %366 = vdwg.mxu0
      %s367 = scalar_lea.vmem %s233, 24
      %368 = vst [vmem:[%s367] sm:$0xff] %v359
      %369 = vst [vmem:[%s367 + $0x8] sm:$0xff] %v361
      %370 = vst [vmem:[%s367 + $0x10] sm:$0x3] %v364
      %s371 = scalar_lea.vmem %s217, 48
      %v372 = vld [vmem:[%s371] sm:$0xff]
      %v373 = vld [vmem:[%s371 + $0x8] sm:$0xff]
      %v374 = vld [vmem:[%s371 + $0x10] sm:$0x3]
      %375 = vset.pattern.permute.xlu0 0
      %376 = vperm.xlu0 %375, %v372
      %v377 = vpop.permute.xlu0 %376
      %378 = vset.pattern.permute.xlu0 0
      %379 = vperm.xlu0 %378, %v373
      %v380 = vpop.permute.xlu0 %379
      %381 = vset.pattern.permute.xlu0 0
      %382 = vperm.xlu0 %381, %v374
      %v383 = vpop.permute.xlu0 %382
      %vm384 = vcmp.eq.s32.totalorder %v377, %v246
      %vm385 = vcmp.eq.s32.totalorder %v380, %v246
      %vm386 = vcmp.eq.s32.totalorder %v383, %v246
      %v387 = vsel %vm384, 1, 0
      %v388 = vsel %vm385, 1, 0
      %v389 = vsel %vm386, 1, 0
      %v390 = vcvt.s32.f32 %v387
      %v391 = vcvt.s32.f32 %v388
      %v392 = vcvt.s32.f32 %v389
      %v393 = vpack.c.bf16 %v391, %v390
      %v394 = vpack.c.bf16 %v392, %v392
      %v396 = vsel %vm287, %v393, 0
      %v399 = vsel %vm287, %v394, 0
      %401 = vmatpush.bf16.msra.mxu0 0
      %402 = vmatpush.bf16.msra.mxu0 0
      %403 = vmatpush.bf16.msra.mxu0 0
      %404 = vmatpush.bf16.msra.mxu0 0
      %405 = vmatpush.bf16.msra.mxu0 0
      %406 = vmatpush.bf16.msra.mxu0 %v296
      %407 = vmatpush.bf16.msra.mxu0 %v283
      %408 = vmatpush.bf16.msra.mxu0 %v282
      %409 = vmatmul.bf16.gmra.mxu0 %v396
      %v410 = vpop.f32.mrf.mxu0
      %v411 = vadd.f32 %v236, %v410
      %v412 = vpop.f32.mrf.mxu0
      %v413 = vadd.f32 %v237, %v412
      %414 = vmatmul.bf16.gmra.mxu0 %v399
      %v415 = vpop.f32.mrf.mxu0
      %v416 = vadd.f32 %v238, %v415
      %v417 = vpop.f32.mrf.mxu0
      %418 = vdwg.mxu0
      %s419 = scalar_lea.vmem %s233, 48
      %420 = vst [vmem:[%s419] sm:$0xff] %v411
      %421 = vst [vmem:[%s419 + $0x8] sm:$0xff] %v413
      %422 = vst [vmem:[%s419 + $0x10] sm:$0x3] %v416
      %s423 = scalar_lea.vmem %s217, 72
      %v424 = vld [vmem:[%s423] sm:$0xff]
      %v425 = vld [vmem:[%s423 + $0x8] sm:$0xff]
      %v426 = vld [vmem:[%s423 + $0x10] sm:$0x3]
      %427 = vset.pattern.permute.xlu0 0
      %428 = vperm.xlu0 %427, %v424
      %v429 = vpop.permute.xlu0 %428
      %430 = vset.pattern.permute.xlu0 0
      %431 = vperm.xlu0 %430, %v425
      %v432 = vpop.permute.xlu0 %431
      %433 = vset.pattern.permute.xlu0 0
      %434 = vperm.xlu0 %433, %v426
      %v435 = vpop.permute.xlu0 %434
      %vm436 = vcmp.eq.s32.totalorder %v429, %v246
      %vm437 = vcmp.eq.s32.totalorder %v432, %v246
      %vm438 = vcmp.eq.s32.totalorder %v435, %v246
      %v439 = vsel %vm436, 1, 0
      %v440 = vsel %vm437, 1, 0
      %v441 = vsel %vm438, 1, 0
      %v442 = vcvt.s32.f32 %v439
      %v443 = vcvt.s32.f32 %v440
      %v444 = vcvt.s32.f32 %v441
      %v445 = vpack.c.bf16 %v443, %v442
      %v446 = vpack.c.bf16 %v444, %v444
      %v448 = vsel %vm287, %v445, 0
      %v451 = vsel %vm287, %v446, 0
      %453 = vmatpush.bf16.msra.mxu0 0
      %454 = vmatpush.bf16.msra.mxu0 0
      %455 = vmatpush.bf16.msra.mxu0 0
      %456 = vmatpush.bf16.msra.mxu0 0
      %457 = vmatpush.bf16.msra.mxu0 0
      %458 = vmatpush.bf16.msra.mxu0 %v296
      %459 = vmatpush.bf16.msra.mxu0 %v283
      %460 = vmatpush.bf16.msra.mxu0 %v282
      %461 = vmatmul.bf16.gmra.mxu0 %v448
      %v462 = vpop.f32.mrf.mxu0
      %v463 = vadd.f32 %v236, %v462
      %v464 = vpop.f32.mrf.mxu0
      %v465 = vadd.f32 %v237, %v464
      %466 = vmatmul.bf16.gmra.mxu0 %v451
      %v467 = vpop.f32.mrf.mxu0
      %v468 = vadd.f32 %v238, %v467
      %v469 = vpop.f32.mrf.mxu0
      %470 = vdwg.mxu0
      %s471 = scalar_lea.vmem %s233, 72
      %472 = vst [vmem:[%s471] sm:$0xff] %v463
      %473 = vst [vmem:[%s471 + $0x8] sm:$0xff] %v465
      %474 = vst [vmem:[%s471 + $0x10] sm:$0x3] %v468
      %s475 = scalar_lea.vmem %s217, 96
      %v476 = vld [vmem:[%s475] sm:$0xff]
      %v477 = vld [vmem:[%s475 + $0x8] sm:$0xff]
      %v478 = vld [vmem:[%s475 + $0x10] sm:$0x3]
      %479 = vset.pattern.permute.xlu0 0
      %480 = vperm.xlu0 %479, %v476
      %v481 = vpop.permute.xlu0 %480
      %482 = vset.pattern.permute.xlu0 0
      %483 = vperm.xlu0 %482, %v477
      %v484 = vpop.permute.xlu0 %483
      %485 = vset.pattern.permute.xlu0 0
      %486 = vperm.xlu0 %485, %v478
      %v487 = vpop.permute.xlu0 %486
      %vm488 = vcmp.eq.s32.totalorder %v481, %v246
      %vm489 = vcmp.eq.s32.totalorder %v484, %v246
      %vm490 = vcmp.eq.s32.totalorder %v487, %v246
      %v491 = vsel %vm488, 1, 0
      %v492 = vsel %vm489, 1, 0
      %v493 = vsel %vm490, 1, 0
      %v494 = vcvt.s32.f32 %v491
      %v495 = vcvt.s32.f32 %v492
      %v496 = vcvt.s32.f32 %v493
      %v497 = vpack.c.bf16 %v495, %v494
      %v498 = vpack.c.bf16 %v496, %v496
      %v500 = vsel %vm287, %v497, 0
      %v503 = vsel %vm287, %v498, 0
      %505 = vmatpush.bf16.msra.mxu0 0
      %506 = vmatpush.bf16.msra.mxu0 0
      %507 = vmatpush.bf16.msra.mxu0 0
      %508 = vmatpush.bf16.msra.mxu0 0
      %509 = vmatpush.bf16.msra.mxu0 0
      %510 = vmatpush.bf16.msra.mxu0 %v296
      %511 = vmatpush.bf16.msra.mxu0 %v283
      %512 = vmatpush.bf16.msra.mxu0 %v282
      %513 = vmatmul.bf16.gmra.mxu0 %v500
      %v514 = vpop.f32.mrf.mxu0
      %v515 = vadd.f32 %v236, %v514
      %v516 = vpop.f32.mrf.mxu0
      %v517 = vadd.f32 %v237, %v516
      %518 = vmatmul.bf16.gmra.mxu0 %v503
      %v519 = vpop.f32.mrf.mxu0
      %v520 = vadd.f32 %v238, %v519
      %v521 = vpop.f32.mrf.mxu0
      %522 = vdwg.mxu0
      %s523 = scalar_lea.vmem %s233, 96
      %524 = vst [vmem:[%s523] sm:$0xff] %v515
      %525 = vst [vmem:[%s523 + $0x8] sm:$0xff] %v517
      %526 = vst [vmem:[%s523 + $0x10] sm:$0x3] %v520
      %s527 = scalar_lea.vmem %s217, 120
      %v528 = vld [vmem:[%s527] sm:$0xff]
      %v529 = vld [vmem:[%s527 + $0x8] sm:$0xff]
      %v530 = vld [vmem:[%s527 + $0x10] sm:$0x3]
      %531 = vset.pattern.permute.xlu0 0
      %532 = vperm.xlu0 %531, %v528
      %v533 = vpop.permute.xlu0 %532
      %534 = vset.pattern.permute.xlu0 0
      %535 = vperm.xlu0 %534, %v529
      %v536 = vpop.permute.xlu0 %535
      %537 = vset.pattern.permute.xlu0 0
      %538 = vperm.xlu0 %537, %v530
      %v539 = vpop.permute.xlu0 %538
      %vm540 = vcmp.eq.s32.totalorder %v533, %v246
      %vm541 = vcmp.eq.s32.totalorder %v536, %v246
      %vm542 = vcmp.eq.s32.totalorder %v539, %v246
      %v543 = vsel %vm540, 1, 0
      %v544 = vsel %vm541, 1, 0
      %v545 = vsel %vm542, 1, 0
      %v546 = vcvt.s32.f32 %v543
      %v547 = vcvt.s32.f32 %v544
      %v548 = vcvt.s32.f32 %v545
      %v549 = vpack.c.bf16 %v547, %v546
      %v550 = vpack.c.bf16 %v548, %v548
      %v552 = vsel %vm287, %v549, 0
      %v555 = vsel %vm287, %v550, 0
      %557 = vmatpush.bf16.msra.mxu0 0
      %558 = vmatpush.bf16.msra.mxu0 0
      %559 = vmatpush.bf16.msra.mxu0 0
      %560 = vmatpush.bf16.msra.mxu0 0
      %561 = vmatpush.bf16.msra.mxu0 0
      %562 = vmatpush.bf16.msra.mxu0 %v296
      %563 = vmatpush.bf16.msra.mxu0 %v283
      %564 = vmatpush.bf16.msra.mxu0 %v282
      %565 = vmatmul.bf16.gmra.mxu0 %v552
      %v566 = vpop.f32.mrf.mxu0
      %v567 = vadd.f32 %v236, %v566
      %v568 = vpop.f32.mrf.mxu0
      %v569 = vadd.f32 %v237, %v568
      %570 = vmatmul.bf16.gmra.mxu0 %v555
      %v571 = vpop.f32.mrf.mxu0
      %v572 = vadd.f32 %v238, %v571
      %v573 = vpop.f32.mrf.mxu0
      %574 = vdwg.mxu0
      %s575 = scalar_lea.vmem %s233, 120
      %576 = vst [vmem:[%s575] sm:$0xff] %v567
      %577 = vst [vmem:[%s575 + $0x8] sm:$0xff] %v569
      %578 = vst [vmem:[%s575 + $0x10] sm:$0x3] %v572
      %s579 = scalar_lea.vmem %s217, 144
      %v580 = vld [vmem:[%s579] sm:$0xff]
      %v581 = vld [vmem:[%s579 + $0x8] sm:$0xff]
      %v582 = vld [vmem:[%s579 + $0x10] sm:$0x3]
      %583 = vset.pattern.permute.xlu0 0
      %584 = vperm.xlu0 %583, %v580
      %v585 = vpop.permute.xlu0 %584
      %586 = vset.pattern.permute.xlu0 0
      %587 = vperm.xlu0 %586, %v581
      %v588 = vpop.permute.xlu0 %587
      %589 = vset.pattern.permute.xlu0 0
      %590 = vperm.xlu0 %589, %v582
      %v591 = vpop.permute.xlu0 %590
      %vm592 = vcmp.eq.s32.totalorder %v585, %v246
      %vm593 = vcmp.eq.s32.totalorder %v588, %v246
      %vm594 = vcmp.eq.s32.totalorder %v591, %v246
      %v595 = vsel %vm592, 1, 0
      %v596 = vsel %vm593, 1, 0
      %v597 = vsel %vm594, 1, 0
      %v598 = vcvt.s32.f32 %v595
      %v599 = vcvt.s32.f32 %v596
      %v600 = vcvt.s32.f32 %v597
      %v601 = vpack.c.bf16 %v599, %v598
      %v602 = vpack.c.bf16 %v600, %v600
      %v604 = vsel %vm287, %v601, 0
      %v607 = vsel %vm287, %v602, 0
      %609 = vmatpush.bf16.msra.mxu0 0
      %610 = vmatpush.bf16.msra.mxu0 0
      %611 = vmatpush.bf16.msra.mxu0 0
      %612 = vmatpush.bf16.msra.mxu0 0
      %613 = vmatpush.bf16.msra.mxu0 0
      %614 = vmatpush.bf16.msra.mxu0 %v296
      %615 = vmatpush.bf16.msra.mxu0 %v283
      %616 = vmatpush.bf16.msra.mxu0 %v282
      %617 = vmatmul.bf16.gmra.mxu0 %v604
      %v618 = vpop.f32.mrf.mxu0
      %v619 = vadd.f32 %v236, %v618
      %v620 = vpop.f32.mrf.mxu0
      %v621 = vadd.f32 %v237, %v620
      %622 = vmatmul.bf16.gmra.mxu0 %v607
      %v623 = vpop.f32.mrf.mxu0
      %v624 = vadd.f32 %v238, %v623
      %v625 = vpop.f32.mrf.mxu0
      %626 = vdwg.mxu0
      %s627 = scalar_lea.vmem %s233, 144
      %628 = vst [vmem:[%s627] sm:$0xff] %v619
      %629 = vst [vmem:[%s627 + $0x8] sm:$0xff] %v621
      %630 = vst [vmem:[%s627 + $0x10] sm:$0x3] %v624
      %s631 = scalar_lea.vmem %s217, 168
      %v632 = vld [vmem:[%s631] sm:$0xff]
      %v633 = vld [vmem:[%s631 + $0x8] sm:$0xff]
      %v634 = vld [vmem:[%s631 + $0x10] sm:$0x3]
      %635 = vset.pattern.permute.xlu0 0
      %636 = vperm.xlu0 %635, %v632
      %v637 = vpop.permute.xlu0 %636
      %638 = vset.pattern.permute.xlu0 0
      %639 = vperm.xlu0 %638, %v633
      %v640 = vpop.permute.xlu0 %639
      %641 = vset.pattern.permute.xlu0 0
      %642 = vperm.xlu0 %641, %v634
      %v643 = vpop.permute.xlu0 %642
      %vm644 = vcmp.eq.s32.totalorder %v637, %v246
      %vm645 = vcmp.eq.s32.totalorder %v640, %v246
      %vm646 = vcmp.eq.s32.totalorder %v643, %v246
      %v647 = vsel %vm644, 1, 0
      %v648 = vsel %vm645, 1, 0
      %v649 = vsel %vm646, 1, 0
      %v650 = vcvt.s32.f32 %v647
      %v651 = vcvt.s32.f32 %v648
      %v652 = vcvt.s32.f32 %v649
      %v653 = vpack.c.bf16 %v651, %v650
      %v654 = vpack.c.bf16 %v652, %v652
      %v656 = vsel %vm287, %v653, 0
      %v659 = vsel %vm287, %v654, 0
      %661 = vmatpush.bf16.msra.mxu0 0
      %662 = vmatpush.bf16.msra.mxu0 0
      %663 = vmatpush.bf16.msra.mxu0 0
      %664 = vmatpush.bf16.msra.mxu0 0
      %665 = vmatpush.bf16.msra.mxu0 0
      %666 = vmatpush.bf16.msra.mxu0 %v296
      %667 = vmatpush.bf16.msra.mxu0 %v283
      %668 = vmatpush.bf16.msra.mxu0 %v282
      %669 = vmatmul.bf16.gmra.mxu0 %v656
      %v670 = vpop.f32.mrf.mxu0
      %v671 = vadd.f32 %v236, %v670
      %v672 = vpop.f32.mrf.mxu0
      %v673 = vadd.f32 %v237, %v672
      %674 = vmatmul.bf16.gmra.mxu0 %v659
      %v675 = vpop.f32.mrf.mxu0
      %v676 = vadd.f32 %v238, %v675
      %v677 = vpop.f32.mrf.mxu0
      %678 = vdwg.mxu0
      %s679 = scalar_lea.vmem %s233, 168
      %680 = vst [vmem:[%s679] sm:$0xff] %v671
      %681 = vst [vmem:[%s679 + $0x8] sm:$0xff] %v673
      %682 = vst [vmem:[%s679 + $0x10] sm:$0x3] %v676
      %s683 = scalar_lea.vmem %s217, 192
      %v684 = vld [vmem:[%s683] sm:$0xff]
      %v685 = vld [vmem:[%s683 + $0x8] sm:$0xff]
      %v686 = vld [vmem:[%s683 + $0x10] sm:$0x3]
      %687 = vset.pattern.permute.xlu0 0
      %688 = vperm.xlu0 %687, %v684
      %v689 = vpop.permute.xlu0 %688
      %690 = vset.pattern.permute.xlu0 0
      %691 = vperm.xlu0 %690, %v685
      %v692 = vpop.permute.xlu0 %691
      %693 = vset.pattern.permute.xlu0 0
      %694 = vperm.xlu0 %693, %v686
      %v695 = vpop.permute.xlu0 %694
      %vm696 = vcmp.eq.s32.totalorder %v689, %v246
      %vm697 = vcmp.eq.s32.totalorder %v692, %v246
      %vm698 = vcmp.eq.s32.totalorder %v695, %v246
      %v699 = vsel %vm696, 1, 0
      %v700 = vsel %vm697, 1, 0
      %v701 = vsel %vm698, 1, 0
      %v702 = vcvt.s32.f32 %v699
      %v703 = vcvt.s32.f32 %v700
      %v704 = vcvt.s32.f32 %v701
      %v705 = vpack.c.bf16 %v703, %v702
      %v706 = vpack.c.bf16 %v704, %v704
      %v708 = vsel %vm287, %v705, 0
      %v711 = vsel %vm287, %v706, 0
      %713 = vmatpush.bf16.msra.mxu0 0
      %714 = vmatpush.bf16.msra.mxu0 0
      %715 = vmatpush.bf16.msra.mxu0 0
      %716 = vmatpush.bf16.msra.mxu0 0
      %717 = vmatpush.bf16.msra.mxu0 0
      %718 = vmatpush.bf16.msra.mxu0 %v296
      %719 = vmatpush.bf16.msra.mxu0 %v283
      %720 = vmatpush.bf16.msra.mxu0 %v282
      %721 = vmatmul.bf16.gmra.mxu0 %v708
      %v722 = vpop.f32.mrf.mxu0
      %v723 = vadd.f32 %v236, %v722
      %v724 = vpop.f32.mrf.mxu0
      %v725 = vadd.f32 %v237, %v724
      %726 = vmatmul.bf16.gmra.mxu0 %v711
      %v727 = vpop.f32.mrf.mxu0
      %v728 = vadd.f32 %v238, %v727
      %v729 = vpop.f32.mrf.mxu0
      %730 = vdwg.mxu0
      %s731 = scalar_lea.vmem %s233, 192
      %732 = vst [vmem:[%s731] sm:$0xff] %v723
      %733 = vst [vmem:[%s731 + $0x8] sm:$0xff] %v725
      %734 = vst [vmem:[%s731 + $0x10] sm:$0x3] %v728
      %s735 = smul.u32 9, %s19
      %p736 = scmp.lt.s32.totalorder %s18, 1
      %s737 = scalar_select %p736, %s18, 1
      %p738 = scmp.lt.s32.totalorder %s735, 8
      %s739 = scalar_select %p738, %s735, 8
      %s740 = smul.addr %s739, 3
      %s741 = smul.addr %s737, 27
      %s742 = sadd.s32 %s740, %s741
      %s743 = smul.addr %s742, 8
      %s744 = scalar_lea.vmem %s3, %s743
      // Predicated region
      $region33: #{tpu_custom_call.1} parent=31 // pred_check
        %p745 = pneg %p121
      $region34: #{tpu_custom_call.1} parent=31 // pred_check_branch
        %747 = sbr.rel (%p745) target = $region36
      $region35: #{tpu_custom_call.1} parent=31 // pred_region
        %s748 = smul.u32 9, %s19
      $region36: #{tpu_custom_call.1} parent=31 // pred_fallthru
        _
    $region32: #{tpu_custom_call.1} parent=5 // pred_fallthru
      _
    %p749 = scmp.le.s32.totalorder 2, %s9
    // Predicated region
    $region37: #{tpu_custom_call.1} parent=5 // pred_check
      %p750 = pneg %p749
    $region38: #{tpu_custom_call.1} parent=5 // pred_check_branch
      %752 = sbr.rel (%p750) target = $region40
    $region39: #{tpu_custom_call.1} parent=5 // pred_region
      %s753 = ssub.s32 %s9, 2
      // Predicated region
      $region41: #{tpu_custom_call.1} parent=39 // pred_check
        %p754 = pneg %p127
      $region42: #{tpu_custom_call.1} parent=39 // pred_check_branch
        %756 = sbr.rel (%p754) target = $region44
      $region43: #{tpu_custom_call.1} parent=39 // pred_region
        %s757 = smul.u32 9, %s21
        %p758 = scmp.lt.s32.totalorder %s20, 1
        %s759 = scalar_select %p758, %s20, 1
        %p760 = scmp.lt.s32.totalorder %s757, 8
        %s761 = scalar_select %p760, %s757, 8
        %s762 = smul.addr %s761, 3
        %s763 = smul.addr %s759, 27
        %s764 = sadd.s32 %s762, %s763
        %s765 = smul.addr %s764, 8
        %s766 = scalar_lea.vmem %s3, %s765
      $region44: #{tpu_custom_call.1} parent=39 // pred_fallthru
        _
    $region40: #{tpu_custom_call.1} parent=5 // pred_fallthru
      _
  $region6: #{tpu_custom_call.1} parent=0 // loop_footer
    %s13 = sadd.s32 1, %s9
  $region7: #{tpu_custom_call.1} parent=0 // loop_footer_branch
    %8 = sbr.rel target = $region3
  $region8: #{tpu_custom_call.1} parent=0 // loop_exit
    _

</llo_original>
